<compile_context>
chip_gen: v6e
topology: v6e:2x2x1
jax: 0.10.0
libtpu: 0.0.40
codegen_flags: <defaults>
</compile_context>

<pallas_src>
import functools

import jax
import jax.numpy as jnp
from jax import lax
from jax.experimental import pallas as pl
from jax.experimental.pallas import tpu as pltpu


def _rmsnorm_kernel(x_ref, g_ref, o_ref, *, eps: float, d_model: int):
    # x_ref : VMEM (T, D)  input row tile
    # g_ref : VMEM (1, D)  gain (same block every grid step)
    # o_ref : VMEM (T, D)  output row tile
    x = x_ref[...].astype(jnp.float32)                              # (T, D)
    g = g_ref[...].astype(jnp.float32)                              # (1, D)

    ms = jnp.sum(x * x, axis=-1, keepdims=True) * (1.0 / d_model)   # (T, 1)
    inv = lax.rsqrt(ms + eps)                                       # EUP rsqrt

    o_ref[...] = (x * g * inv).astype(o_ref.dtype)


def _round_up(n: int, m: int) -> int:
    return ((n + m - 1) // m) * m


def _pick_tiling(N: int, D: int, itemsize: int):
    """Choose the row tile T and an explicit VMEM limit for this chip."""
    # Minimum sublane multiple for the I/O dtype (f32: 8, bf16: 16, int8: 32).
    sub = max(8, 32 // itemsize)

    # Per-TC VMEM capacity; fall back to the smallest (v7x: 64 MiB) if the
    # query is unavailable.
    try:
        vmem_cap = int(getattr(pltpu.get_tpu_info(), "vmem_capacity_bytes"))
    except Exception:
        vmem_cap = 64 * 1024 * 1024

    # Working-set budget: double-buffered input + output tiles plus ~3 f32
    # temporaries for the in-kernel cast/compute.  Keep well under capacity.
    budget = min(vmem_cap // 2, 48 * 1024 * 1024)
    per_row_bytes = D * (2 * 2 * itemsize + 3 * 4)
    t_budget = max(sub, (budget // per_row_bytes) // sub * sub)

    # Keep >= ~8 grid steps (v7x megacore load balance); never exceed N.
    t_steps = _round_up(pl.cdiv(N, 8), sub)
    T = max(sub, min(t_budget, t_steps, _round_up(N, sub)))

    # Explicit scoped-VMEM limit: pipelined I/O + f32 temps + slack,
    # clamped to physical capacity.  Raises the 16/32 MiB defaults when the
    # large tiles need it.
    io_bytes = 2 * T * D * 2 * itemsize          # double-buffered in + out
    tmp_bytes = 4 * T * D * 4                    # f32 intermediates (generous)
    vmem_limit = max(32 << 20,
                     min(vmem_cap - (4 << 20), io_bytes + tmp_bytes + (8 << 20)))
    return T, int(vmem_limit)


def rmsnorm_forward(x: jax.Array, gain: jax.Array, *, eps: float = 1e-5) -> jax.Array:
    """RMSNorm over the last dim of x (B, S, D) with per-channel gain (D,)."""
    B, S, D = x.shape
    assert gain.shape == (D,)
    N = B * S
    in_dtype = x.dtype
    itemsize = jnp.dtype(in_dtype).itemsize

    T, vmem_limit = _pick_tiling(N, D, itemsize)

    # Contiguous reshapes: no extra HBM traffic (unlike pad/slice).
    x_flat = x.reshape(N, D)
    gain_2d = gain.reshape(1, D)

    kernel = functools.partial(_rmsnorm_kernel, eps=eps, d_model=D)

    # TODO(synk): if D is not a multiple of 128 (per-head norms), stores are
    # masked partial vst; typical transformer D is already lane-dense.
    out_flat = pl.pallas_call(
        kernel,
        out_shape=jax.ShapeDtypeStruct((N, D), in_dtype),
        grid_spec=pltpu.PrefetchScalarGridSpec(
            num_scalar_prefetch=0,
            grid=(pl.cdiv(N, T),),               # ragged trailing block OK:
            in_specs=[                           # row-wise op, OOB rows discarded
                pl.BlockSpec((T, D), lambda i: (i, 0)),   # x row tile
                pl.BlockSpec((1, D), lambda i: (0, 0)),   # gain (tiny, reused)
            ],
            out_specs=pl.BlockSpec((T, D), lambda i: (i, 0)),
        ),
        compiler_params=pltpu.CompilerParams(
            # Rows are fully independent -> let v7x shard across both TCs.
            dimension_semantics=("parallel",),
            vmem_limit_bytes=vmem_limit,
        ),
    )(x_flat, gain_2d)

    return out_flat.reshape(B, S, D)


def rmsnorm_reference(x: jax.Array, gain: jax.Array, eps: float = 1e-5) -> jax.Array:
    in_dtype = x.dtype
    xf = x.astype(jnp.float32)
    denom = jnp.sqrt(jnp.mean(xf * xf, axis=-1, keepdims=True) + eps)
    return (xf * gain.astype(jnp.float32) / denom).astype(in_dtype)


if __name__ == "__main__":
    key = jax.random.PRNGKey(0)
    k_x, k_g, k_x2 = jax.random.split(key, 3)
    eps = 1e-5

    # Case 1: lane-dense D (multiple of 128), N a multiple of the row tile.
    B, S, D = 2, 8, 128
    x = jax.random.normal(k_x, (B, S, D), dtype=jnp.float32)
    # Module initializes gain to ones; perturb slightly so the test is non-trivial.
    gain = jnp.ones((D,), dtype=jnp.float32) + 0.01 * jax.random.normal(k_g, (D,))

    out = jax.block_until_ready(rmsnorm_forward(x, gain, eps=eps))
    ref = rmsnorm_reference(x, gain, eps=eps)
    assert out.shape == (B, S, D)
    assert out.dtype == x.dtype
    assert jnp.allclose(out, ref, atol=1e-5, rtol=1e-5)

    # Case 2: ragged row count (N not a multiple of the row tile) — exercises
    # the partial trailing block with no host-side padding/slicing copies.
    B2, S2, D2 = 3, 5, 64
    x2 = jax.random.normal(k_x2, (B2, S2, D2), dtype=jnp.float32)
    g2 = jnp.ones((D2,), dtype=jnp.float32)
    out2 = jax.block_until_ready(rmsnorm_forward(x2, g2, eps=eps))
    ref2 = rmsnorm_reference(x2, g2, eps=eps)
    assert out2.shape == (B2, S2, D2)
    assert jnp.allclose(out2, ref2, atol=1e-5, rtol=1e-5)

    print("KERNEL_OK")
</pallas_src>

<mosaic_0001>
module attributes {stable_mosaic.version = 11 : i64} {
  func.func @_rmsnorm_kernel(%arg0: i32, %arg1: memref<8x128xf32, #tpu.memory_space<vmem>>, %arg2: memref<1x128xf32, #tpu.memory_space<vmem>>, %arg3: memref<8x128xf32, #tpu.memory_space<vmem>>) attributes {dimension_semantics = [#tpu.dimension_semantics<parallel>], iteration_bounds = array<i64: 2>, scalar_prefetch = 0 : i64, scratch_operands = 0 : i64, tpu.core_type = #tpu.core_type<tc>, window_params = [{transform_indices = @transform_0, window_bounds = array<i64: 8, 128>}, {pipeline_mode = #tpu.pipeline_mode<synchronous>, transform_indices = @transform_1, window_bounds = array<i64: 1, 128>}, {transform_indices = @transform_2, window_bounds = array<i64: 8, 128>}]} {
    %c0 = arith.constant 0 : index
    %c0_0 = arith.constant 0 : index
    %0 = vector.load %arg1[%c0, %c0_0] : memref<8x128xf32, #tpu.memory_space<vmem>>, vector<8x128xf32>
    %c0_1 = arith.constant 0 : index
    %c0_2 = arith.constant 0 : index
    %1 = vector.load %arg2[%c0_1, %c0_2] : memref<1x128xf32, #tpu.memory_space<vmem>>, vector<1x128xf32>
    %2 = arith.mulf %0, %0 : vector<8x128xf32>
    %cst = arith.constant dense<0.000000e+00> : vector<8xf32>
    %3 = vector.multi_reduction <add>, %2, %cst [1] : vector<8x128xf32> to vector<8xf32>
    %4 = vector.shape_cast %3 : vector<8xf32> to vector<8x1xf32>
    %cst_3 = arith.constant 7.812500e-03 : f32
    %5 = vector.broadcast %cst_3 : f32 to vector<8x1xf32>
    %6 = arith.mulf %4, %5 : vector<8x1xf32>
    %cst_4 = arith.constant 9.99999974E-6 : f32
    %7 = vector.broadcast %cst_4 : f32 to vector<8x1xf32>
    %8 = arith.addf %6, %7 : vector<8x1xf32>
    %9 = math.rsqrt %8 : vector<8x1xf32>
    %10 = vector.broadcast %1 : vector<1x128xf32> to vector<8x128xf32>
    %11 = arith.mulf %0, %10 : vector<8x128xf32>
    %12 = vector.broadcast %9 : vector<8x1xf32> to vector<8x128xf32>
    %13 = arith.mulf %11, %12 : vector<8x128xf32>
    %c0_5 = arith.constant 0 : index
    %c0_6 = arith.constant 0 : index
    %14 = vector.load %arg3[%c0_5, %c0_6] : memref<8x128xf32, #tpu.memory_space<vmem>>, vector<8x128xf32>
    tpu.vector_store %arg3[%c0_5, %c0_6], %13 {strides = array<i32>} : memref<8x128xf32, #tpu.memory_space<vmem>>, vector<8x128xf32>,
    return
  }
  func.func @transform_0(%arg0: i32) -> (i32, i32) {
    %c0_i32 = arith.constant 0 : i32
    %c0_i32_0 = arith.constant 0 : i32
    return %arg0, %c0_i32 : i32, i32
  }
  func.func @transform_1(%arg0: i32) -> (i32, i32) {
    %c0_i32 = arith.constant 0 : i32
    %c0_i32_0 = arith.constant 0 : i32
    %c0_i32_1 = arith.constant 0 : i32
    return %c0_i32, %c0_i32_0 : i32, i32
  }
  func.func @transform_2(%arg0: i32) -> (i32, i32) {
    %c0_i32 = arith.constant 0 : i32
    %c0_i32_0 = arith.constant 0 : i32
    return %arg0, %c0_i32 : i32, i32
  }
}

</mosaic_0001>

<llo_original>
// kernel: tpu_custom_call.1
$region0: #{tpu_custom_call.1}
  #allocation0 [shape = 'u32[]', space=smem, size = 0x4, offset = 0x4, fixed_abs, tag = 'smem constant byte address 0x4 - core index']
  #allocation1 [shape = 'u32[144,128]{1,0:T(1,128)}', space=vmem, size = 0x12000, scoped, tag = 'internal scratch']
  %s0 = inlined_call_operand.hbm [shape: f32[16,128], index: 0, kind: input, shape index: {}]
  %s1 = inlined_call_operand.vmem [shape: f32[1,128], index: 1, kind: input, shape index: {}]
  %s2 = inlined_call_operand.hbm [shape: f32[16,128], index: 2, kind: output, shape index: {}]
  %s3 = sld [smem:[#allocation0]]
  $region45: #{tpu_custom_call.1} parent=0
    _
  %s5 = ssub.s32 1, %s3
  %s6 = scalar_select 0, %s5, %s3
  $region1: #{tpu_custom_call.1} parent=0
    #allocation2 [shape = 'u8[8192]{0}', space=vmem, size = 0x2000, scoped, tag = 'input window, operand 0']
    #allocation3 [shape = 's32[2]{0}', space=sflag, size = 0x8, scoped, tag = 'scoped memory for tpu_custom_call.1']
    #allocation4 [shape = 's32[2]{0}', space=sflag, size = 0x8, scoped, tag = 'scoped memory for tpu_custom_call.1']
    #allocation5 [shape = 'u8[8192]{0}', space=vmem, size = 0x2000, scoped, tag = 'output window, operand 0']
    %7 = vsyncpa [#allocation3], 0
    %s8 = scalar_lea.sflag [#allocation3], 1
    %9 = vsyncpa %s8, 0
    %10 = vsyncpa [#allocation4], 0
    %s11 = scalar_lea.sflag [#allocation4], 1
    %12 = vsyncpa %s11, 0
    loop: start=0, step=1, limit=4
    $region2: #{tpu_custom_call.1} parent=1 // loop_pre_header
      _
    $region3: #{tpu_custom_call.1} parent=1 // loop_header
      %s14 = sphi 0, %s18
      %p15 = scmp.ge.s32.totalorder %s14, 4
      %s24 = sphi 0, %s26
      %s27 = sphi 0, %s24
      %s28 = sphi 0, %s27
      %s44 = sphi 0, %s28
      %s48 = sphi 0, %s48
      %s50 = sphi 0, %s48
      %s51 = sphi 0, %s50
      %s65 = sphi 0, %s51
      %s71 = sphi 0, %s73
      %s74 = sphi 0, %s71
      %s75 = sphi 0, %s74
      %s91 = sphi 0, %s75
    $region4: #{tpu_custom_call.1} parent=1 // loop_header_branch
      %17 = sbr.rel (%p15) target = $region8
    $region5: #{tpu_custom_call.1} parent=1 // loop_body
      %s19 = ssub.s32 %s14, 1
      %s20 = ssub.s32 %s14, 2
      %s21 = sadd.s32 %s14, 1
      %s22 = ssub.s32 %s14, %s21
      %p23 = scmp.eq.s32.totalorder %s22, 0
      %s25 = sadd.s32 %s24, 1
      %s26 = scalar_select %p23, %s24, %s25
      %p29 = pneg %p23
      %p30 = scmp.eq.s32.totalorder %s14, 1
      %p31 = por %p29, %p30
      %p32 = scmp.ne.s32.totalorder %s24, %s27
      %p33 = scmp.eq.s32.totalorder %s14, 0
      %p34 = por %p32, %p33
      %p35 = scmp.ne.s32.totalorder %s24, %s27
      %p36 = scmp.eq.s32.totalorder %s19, 1
      %p37 = por %p35, %p36
      %p38 = scmp.ne.s32.totalorder %s27, %s28
      %p39 = scmp.eq.s32.totalorder %s19, 0
      %p40 = por %p38, %p39
      %p41 = scmp.ne.s32.totalorder %s27, %s28
      %p42 = scmp.eq.s32.totalorder %s20, 1
      %p43 = por %p41, %p42
      %p45 = scmp.ne.s32.totalorder %s28, %s44
      %p46 = scmp.eq.s32.totalorder %s20, 0
      %p47 = por %p45, %p46
      %s49 = sadd.s32 %s48, 1
      %p52 = scmp.eq.s32.totalorder %s14, 1
      %p53 = scmp.ne.s32.totalorder %s48, %s50
      %p54 = scmp.eq.s32.totalorder %s14, 0
      %p55 = por %p53, %p54
      %p56 = scmp.ne.s32.totalorder %s48, %s50
      %p57 = scmp.eq.s32.totalorder %s19, 1
      %p58 = por %p56, %p57
      %p59 = scmp.ne.s32.totalorder %s50, %s51
      %p60 = scmp.eq.s32.totalorder %s19, 0
      %p61 = por %p59, %p60
      %p62 = scmp.ne.s32.totalorder %s50, %s51
      %p63 = scmp.eq.s32.totalorder %s20, 1
      %p64 = por %p62, %p63
      %p66 = scmp.ne.s32.totalorder %s51, %s65
      %p67 = scmp.eq.s32.totalorder %s20, 0
      %p68 = por %p66, %p67
      %s69 = ssub.s32 %s14, %s21
      %p70 = scmp.eq.s32.totalorder %s69, 0
      %s72 = sadd.s32 %s71, 1
      %s73 = scalar_select %p70, %s71, %s72
      %p76 = pneg %p70
      %p77 = scmp.eq.s32.totalorder %s14, 1
      %p78 = por %p76, %p77
      %p79 = scmp.ne.s32.totalorder %s71, %s74
      %p80 = scmp.eq.s32.totalorder %s14, 0
      %p81 = por %p79, %p80
      %p82 = scmp.ne.s32.totalorder %s71, %s74
      %p83 = scmp.eq.s32.totalorder %s19, 1
      %p84 = por %p82, %p83
      %p85 = scmp.ne.s32.totalorder %s74, %s75
      %p86 = scmp.eq.s32.totalorder %s19, 0
      %p87 = por %p85, %p86
      %p88 = scmp.ne.s32.totalorder %s74, %s75
      %p89 = scmp.eq.s32.totalorder %s20, 1
      %p90 = por %p88, %p89
      %p92 = scmp.ne.s32.totalorder %s75, %s91
      %p93 = scmp.eq.s32.totalorder %s20, 0
      %p94 = por %p92, %p93
      %p95 = scmp.le.s32.totalorder 1, %s14
      %p96 = scmp.lt.s32.totalorder %s14, 3
      %p97 = pnand %p95, %p96
      %p98 = pneg %p97
      // Predicated region
      $region9: #{tpu_custom_call.1} parent=5 // pred_check
        _
      $region10: #{tpu_custom_call.1} parent=5 // pred_check_branch
        %100 = sbr.rel (%p97) target = $region12
      $region11: #{tpu_custom_call.1} parent=5 // pred_region
        %s101 = ssub.s32 %s14, 1
        // Predicated region
        $region13: #{tpu_custom_call.1} parent=11 // pred_check
          %p102 = pneg %p61
        $region14: #{tpu_custom_call.1} parent=11 // pred_check_branch
          %104 = sbr.rel (%p102) target = $region16
        $region15: #{tpu_custom_call.1} parent=11 // pred_region
          _
        $region16: #{tpu_custom_call.1} parent=11 // pred_fallthru
          _
      $region12: #{tpu_custom_call.1} parent=5 // pred_fallthru
        _
      %p105 = scmp.lt.s32.totalorder %s14, 2
      // Predicated region
      $region17: #{tpu_custom_call.1} parent=5 // pred_check
        %p106 = pneg %p105
      $region18: #{tpu_custom_call.1} parent=5 // pred_check_branch
        %108 = sbr.rel (%p106) target = $region20
      $region19: #{tpu_custom_call.1} parent=5 // pred_region
        // Predicated region
        $region21: #{tpu_custom_call.1} parent=19 // pred_check
          %p109 = pneg %p34
        $region22: #{tpu_custom_call.1} parent=19 // pred_check_branch
          %111 = sbr.rel (%p109) target = $region24
        $region23: #{tpu_custom_call.1} parent=19 // pred_region
          %s112 = sand.u32 %s24, 1
          %s113 = scalar_lea.sflag [#allocation3], %s112
          %s114 = sand.u32 %s24, 1
          %s115 = smul.addr %s114, 8
          %s116 = scalar_lea.vmem [#allocation2], %s115
          %s118 = ssub.s32 128, 128
          %119 = vsyncadd %s113, %s118
          %s120 = smul.addr %s14, 128
          %s121 = scalar_lea.hbm %s0, %s120
          %s123 = sshll.u32 %s116, 4
          %s124 = int_to_ptr.vmem [resolvable:$true] %s123
          %126 = dma.hbm_to_vmem [thread:$0]  %s121, 128, %s124, %s113
        $region24: #{tpu_custom_call.1} parent=19 // pred_fallthru
          _
      $region20: #{tpu_custom_call.1} parent=5 // pred_fallthru
        _
      %p127 = scmp.le.s32.totalorder 1, %s14
      %p128 = scmp.lt.s32.totalorder %s14, 3
      %p129 = pnand %p127, %p128
      %p130 = pneg %p129
      // Predicated region
      $region25: #{tpu_custom_call.1} parent=5 // pred_check
        _
      $region26: #{tpu_custom_call.1} parent=5 // pred_check_branch
        %132 = sbr.rel (%p129) target = $region28
      $region27: #{tpu_custom_call.1} parent=5 // pred_region
        %s133 = ssub.s32 %s14, 1
        %s134 = sand.u32 %s27, 1
        %s135 = scalar_lea.sflag [#allocation3], %s134
        %s136 = sand.u32 %s27, 1
        %s137 = smul.addr %s136, 8
        %s138 = scalar_lea.vmem [#allocation2], %s137
        // Predicated region
        $region29: #{tpu_custom_call.1} parent=27 // pred_check
          %p139 = pneg %p40
        $region30: #{tpu_custom_call.1} parent=27 // pred_check_branch
          %141 = sbr.rel (%p139) target = $region32
        $region31: #{tpu_custom_call.1} parent=27 // pred_region
          %142 = dma.done %s135, 128
        $region32: #{tpu_custom_call.1} parent=27 // pred_fallthru
          _
        %s143 = sand.u32 %s27, 1
        %s144 = scalar_lea.sflag [#allocation3], %s143
        %s145 = sand.u32 %s27, 1
        %s146 = smul.addr %s145, 8
        %s147 = scalar_lea.vmem [#allocation2], %s146
        %p148 = pneg %p40
        %p149 = pneg %p37
        %p150 = pneg %p61
        %p151 = pneg %p58
        %p152 = pneg %p87
        %p153 = pneg %p84
        %s154 = sand.u32 %s74, 1
        %s155 = scalar_lea.sflag [#allocation4], %s154
        %s156 = sand.u32 %s74, 1
        %s157 = smul.addr %s156, 8
        %s158 = scalar_lea.vmem [#allocation5], %s157
        %v159 = vld [vmem:[%s138] sm:$0xff]
        %v160 = vld [vmem:[%s1] sm:$0x1]
        %v161 = vmul.f32 %v159, %v159
        %162 = vadd.xlane.f32.xlu0 %v161
        %v163 = vpop.xlane.xlu0 %162
        %v164 = vmul.f32 %v163, 0.0078125
        %v165 = vadd.f32 %v164, 1e-05
        %v166 = vrsqrt.pop %v165
        %v168 = vlaneseq
        %v169 = vshrl.u32 %v168, 7
        %v170 = vsub.s32 0, %v169
        %v171 = vrot.slane %v160, %v170
        %v173 = vmul.f32 %v159, %v171
        %v174 = vmul.f32 %v173, %v166
        %175 = vst [vmem:[%s158] sm:$0xff] %v174
        %s176 = sand.u32 %s74, 1
        %s177 = scalar_lea.sflag [#allocation4], %s176
        %s178 = sand.u32 %s74, 1
        %s179 = smul.addr %s178, 8
        %s180 = scalar_lea.vmem [#allocation5], %s179
        // Predicated region
        $region33: #{tpu_custom_call.1} parent=27 // pred_check
          %p181 = pneg %p84
        $region34: #{tpu_custom_call.1} parent=27 // pred_check_branch
          %183 = sbr.rel (%p181) target = $region36
        $region35: #{tpu_custom_call.1} parent=27 // pred_region
          %s185 = ssub.s32 128, 128
          %186 = vsyncadd %s177, %s185
          %s187 = smul.addr %s19, 128
          %s188 = scalar_lea.hbm %s2, %s187
          %s190 = sshll.u32 %s180, 4
          %s191 = int_to_ptr.vmem [resolvable:$true] %s190
          %193 = dma.vmem_to_hbm [thread:$0]  %s191, 128, %s188, %s177
        $region36: #{tpu_custom_call.1} parent=27 // pred_fallthru
          _
      $region28: #{tpu_custom_call.1} parent=5 // pred_fallthru
        _
      %p194 = scmp.le.s32.totalorder 2, %s14
      // Predicated region
      $region37: #{tpu_custom_call.1} parent=5 // pred_check
        %p195 = pneg %p194
      $region38: #{tpu_custom_call.1} parent=5 // pred_check_branch
        %197 = sbr.rel (%p195) target = $region40
      $region39: #{tpu_custom_call.1} parent=5 // pred_region
        %s198 = ssub.s32 %s14, 2
        // Predicated region
        $region41: #{tpu_custom_call.1} parent=39 // pred_check
          %p199 = pneg %p90
        $region42: #{tpu_custom_call.1} parent=39 // pred_check_branch
          %201 = sbr.rel (%p199) target = $region44
        $region43: #{tpu_custom_call.1} parent=39 // pred_region
          %s202 = sand.u32 %s75, 1
          %s203 = scalar_lea.sflag [#allocation4], %s202
          %s204 = sand.u32 %s75, 1
          %s205 = smul.addr %s204, 8
          %s206 = scalar_lea.vmem [#allocation5], %s205
          %207 = dma.done %s203, 128
        $region44: #{tpu_custom_call.1} parent=39 // pred_fallthru
          _
      $region40: #{tpu_custom_call.1} parent=5 // pred_fallthru
        _
    $region6: #{tpu_custom_call.1} parent=1 // loop_footer
      %s18 = sadd.s32 1, %s14
    $region7: #{tpu_custom_call.1} parent=1 // loop_footer_branch
      %13 = sbr.rel target = $region3
    $region8: #{tpu_custom_call.1} parent=1 // loop_exit
      _
    %208 = vsyncpa [#allocation3], 1
    %s209 = scalar_lea.sflag [#allocation3], 1
    %210 = vsyncpa %s209, 1
    %211 = vsyncpa [#allocation4], 1
    %s212 = scalar_lea.sflag [#allocation4], 1
    %213 = vsyncpa %s212, 1

</llo_original>
